<compile_context>
chip_gen: v7x
topology: tpu7x:2x2x1
jax: 0.10.0
libtpu: 0.0.40
codegen_flags: <defaults>
</compile_context>

<pallas_src>
import functools

import jax
import jax.numpy as jnp
from jax.experimental import pallas as pl
from jax.experimental.pallas import tpu as pltpu


_CHUNK = 128  # rows per inner-loop chunk; keeps h1/h2 comfortably vreg-resident.


def _fnn_kernel(x_ref, w1_ref, b1_ref, w2_ref, b2_ref, w3_ref, b3_ref, o_ref,
                *, chunk):
    # x_ref: (bt, D)   w1:(D,H1) b1:(1,H1) w2:(H1,H2) b2:(1,H2) w3:(H2,O) b3:(1,O)
    # o_ref: (bt, O)
    cdt = w1_ref.dtype  # compute dtype = parameter dtype (f32 or bf16)

    # Hoist parameter loads out of the chunk loop (JAX does not CSE re-loads /
    # broadcasts across loop iterations).  Biases arrive already in f32.
    w1 = w1_ref[...]
    w2 = w2_ref[...]
    w3 = w3_ref[...]
    b1 = b1_ref[...]
    b2 = b2_ref[...]
    b3 = b3_ref[...]

    n_chunks = x_ref.shape[0] // chunk

    def body(c, carry):
        r0 = pl.multiple_of(c * chunk, chunk)
        x_c = x_ref[pl.ds(r0, chunk), :].astype(cdt)               # (chunk, D)
        h1 = jnp.dot(x_c, w1, preferred_element_type=jnp.float32)  # (chunk, H1)
        h1 = jnp.maximum(h1 + b1, 0.0).astype(cdt)
        h2 = jnp.dot(h1, w2, preferred_element_type=jnp.float32)   # (chunk, H2)
        h2 = jnp.maximum(h2 + b2, 0.0).astype(cdt)
        y = jnp.dot(h2, w3, preferred_element_type=jnp.float32) + b3
        o_ref[pl.ds(r0, chunk), :] = y.astype(o_ref.dtype)
        return carry

    jax.lax.fori_loop(0, n_chunks, body, 0)


def _round_up(a, m):
    return ((a + m - 1) // m) * m


@functools.partial(jax.jit, static_argnames=("batch_tile",))
def fnn_online_forward(x, params, batch_tile=8192):
    """Forward pass of FNNOnlineModel.

    x: (B, D) or (B, T, F) with T*F == input_dim (flattened like PyTorch).
    params: dict of w1 (D,H1), b1 (1,H1), w2 (H1,H2), b2 (1,H2),
            w3 (H2,4), b3 (1,4).  fp32 or bf16.
    """
    if x.ndim == 3:
        x = x.reshape(x.shape[0], -1)

    B, D = x.shape
    w1, b1 = params["w1"], params["b1"]
    w2, b2 = params["w2"], params["b2"]
    w3, b3 = params["w3"], params["b3"]
    assert w1.shape[0] == D, (w1.shape, D)
    out_dim = w3.shape[1]

    # ---- batch tile selection ----------------------------------------------
    rounded8 = _round_up(B, 8)
    if rounded8 <= _CHUNK:
        bt = rounded8                                # tiny batch: one tile, one chunk
    else:
        rounded = _round_up(B, _CHUNK)
        bt = min(batch_tile, rounded)
        # Give the "parallel" batch axis >= 2 grid steps whenever the batch
        # allows it, so both TensorCores get work on v7x.
        if bt == rounded and bt >= 2 * _CHUNK:
            bt = _round_up(bt // 2, _CHUNK)
    padded_B = _round_up(B, bt)
    grid = (padded_B // bt,)
    chunk = min(_CHUNK, bt)                          # always divides bt

    if padded_B != B:
        # Only happens when B is not a multiple of the tile; no transpose.
        x = jnp.pad(x, ((0, padded_B - B), (0, 0)))

    # Biases as f32 rows, prepared once (tiny; fused into the jit).
    b1r = jnp.reshape(b1, (1, -1)).astype(jnp.float32)
    b2r = jnp.reshape(b2, (1, -1)).astype(jnp.float32)
    b3r = jnp.reshape(b3, (1, -1)).astype(jnp.float32)

    kernel = functools.partial(_fnn_kernel, chunk=chunk)

    out = pl.pallas_call(
        kernel,
        out_shape=jax.ShapeDtypeStruct((padded_B, out_dim), x.dtype),
        grid_spec=pltpu.PrefetchScalarGridSpec(
            num_scalar_prefetch=0,
            grid=grid,
            in_specs=[
                # activations: tile over the batch (rows), full feature dim.
                pl.BlockSpec((bt, D), lambda i: (i, 0)),
                # weights / biases: whole arrays, constant block index
                # (Pallas skips the re-DMA when the block index repeats).
                pl.BlockSpec(w1.shape, lambda i: (0, 0)),
                pl.BlockSpec(b1r.shape, lambda i: (0, 0)),
                pl.BlockSpec(w2.shape, lambda i: (0, 0)),
                pl.BlockSpec(b2r.shape, lambda i: (0, 0)),
                pl.BlockSpec(w3.shape, lambda i: (0, 0)),
                pl.BlockSpec(b3r.shape, lambda i: (0, 0)),
            ],
            out_specs=pl.BlockSpec((bt, out_dim), lambda i: (i, 0)),
        ),
        compiler_params=pltpu.CompilerParams(
            dimension_semantics=("parallel",)),
    )(x, w1, b1r, w2, b2r, w3, b3r)

    # TODO(synk): biases could be folded into the matmuls via a ones-column,
    # but the per-chunk VPU adds are not on the critical path.
    return out[:B] if padded_B != B else out


def init_params(key, input_dim=7, hidden_units=64, out_dim=4,
                dtype=jnp.float32):
    """Deterministic synthetic parameters matching the module's shapes."""
    k1, k2, k3, k4, k5, k6 = jax.random.split(key, 6)
    h2 = hidden_units // 2
    s1 = 1.0 / jnp.sqrt(input_dim)
    s2 = 1.0 / jnp.sqrt(hidden_units)
    s3 = 1.0 / jnp.sqrt(h2)
    return {
        "w1": jax.random.uniform(k1, (input_dim, hidden_units), dtype, -s1, s1),
        "b1": jax.random.uniform(k2, (1, hidden_units), dtype, -s1, s1),
        "w2": jax.random.uniform(k3, (hidden_units, h2), dtype, -s2, s2),
        "b2": jax.random.uniform(k4, (1, h2), dtype, -s2, s2),
        "w3": jax.random.uniform(k5, (h2, out_dim), dtype, -s3, s3),
        "b3": jax.random.uniform(k6, (1, out_dim), dtype, -s3, s3),
    }


def _reference_forward(x, params):
    if x.ndim == 3:
        x = x.reshape(x.shape[0], -1)
    hp = jax.lax.Precision.HIGHEST
    h = jnp.maximum(jnp.dot(x, params["w1"], precision=hp) + params["b1"], 0.0)
    h = jnp.maximum(jnp.dot(h, params["w2"], precision=hp) + params["b2"], 0.0)
    return jnp.dot(h, params["w3"], precision=hp) + params["b3"]


if __name__ == "__main__":
    key = jax.random.PRNGKey(0)
    pkey, k1, k2 = jax.random.split(key, 3)

    input_dim = 7
    params = init_params(pkey, input_dim=input_dim)

    # --- fp32, 2-D input.  B=520 exercises the multi-step grid (2 steps),
    # --- the multi-chunk inner loop (3 chunks/tile) and row padding. --------
    B = 520
    x = jax.random.normal(k1, (B, input_dim), dtype=jnp.float32)
    out = jax.block_until_ready(fnn_online_forward(x, params))
    ref = _reference_forward(x, params)
    assert out.shape == (B, 4), out.shape
    assert jnp.allclose(out, ref, atol=2e-3, rtol=2e-3), "fp32 mismatch"

    # --- fp32, 3-D input (flattened like the PyTorch forward) ---------------
    x3 = jax.random.normal(k2, (4, input_dim, 1), dtype=jnp.float32)
    out3 = jax.block_until_ready(fnn_online_forward(x3, params))
    ref3 = _reference_forward(x3, params)
    assert out3.shape == (4, 4), out3.shape
    assert jnp.allclose(out3, ref3, atol=2e-3, rtol=2e-3), "3-D mismatch"

    # --- bf16 params + bf16 x (single-pass bf16 MXU, f32 accumulation) ------
    params_bf = jax.tree_util.tree_map(lambda a: a.astype(jnp.bfloat16), params)
    x_bf = x[:128].astype(jnp.bfloat16)
    out_bf = jax.block_until_ready(fnn_online_forward(x_bf, params_bf))
    ref_bf = _reference_forward(
        x_bf.astype(jnp.float32),
        jax.tree_util.tree_map(lambda a: a.astype(jnp.float32), params_bf))
    assert out_bf.shape == (128, 4), out_bf.shape
    assert jnp.allclose(out_bf.astype(jnp.float32), ref_bf,
                        atol=5e-2, rtol=5e-2), "bf16 mismatch"

    print("KERNEL_OK")
</pallas_src>

<mosaic_0001>
module attributes {stable_mosaic.version = 11 : i64} {
  func.func @_fnn_kernel(%arg0: i32, %arg1: memref<384x7xf32, #tpu.memory_space<vmem>>, %arg2: memref<7x64xf32, #tpu.memory_space<vmem>>, %arg3: memref<1x64xf32, #tpu.memory_space<vmem>>, %arg4: memref<64x32xf32, #tpu.memory_space<vmem>>, %arg5: memref<1x32xf32, #tpu.memory_space<vmem>>, %arg6: memref<32x4xf32, #tpu.memory_space<vmem>>, %arg7: memref<1x4xf32, #tpu.memory_space<vmem>>, %arg8: memref<384x4xf32, #tpu.memory_space<vmem>>) attributes {dimension_semantics = [#tpu.dimension_semantics<parallel>], iteration_bounds = array<i64: 2>, scalar_prefetch = 0 : i64, scratch_operands = 0 : i64, tpu.core_type = #tpu.core_type<tc>, window_params = [{transform_indices = @transform_0, window_bounds = array<i64: 384, 7>}, {pipeline_mode = #tpu.pipeline_mode<synchronous>, transform_indices = @transform_1, window_bounds = array<i64: 7, 64>}, {pipeline_mode = #tpu.pipeline_mode<synchronous>, transform_indices = @transform_2, window_bounds = array<i64: 1, 64>}, {pipeline_mode = #tpu.pipeline_mode<synchronous>, transform_indices = @transform_3, window_bounds = array<i64: 64, 32>}, {pipeline_mode = #tpu.pipeline_mode<synchronous>, transform_indices = @transform_4, window_bounds = array<i64: 1, 32>}, {pipeline_mode = #tpu.pipeline_mode<synchronous>, transform_indices = @transform_5, window_bounds = array<i64: 32, 4>}, {pipeline_mode = #tpu.pipeline_mode<synchronous>, transform_indices = @transform_6, window_bounds = array<i64: 1, 4>}, {transform_indices = @transform_7, window_bounds = array<i64: 384, 4>}]} {
    %c0 = arith.constant 0 : index
    %c0_0 = arith.constant 0 : index
    %0 = vector.load %arg2[%c0, %c0_0] : memref<7x64xf32, #tpu.memory_space<vmem>>, vector<7x64xf32>
    %c0_1 = arith.constant 0 : index
    %c0_2 = arith.constant 0 : index
    %1 = vector.load %arg4[%c0_1, %c0_2] : memref<64x32xf32, #tpu.memory_space<vmem>>, vector<64x32xf32>
    %c0_3 = arith.constant 0 : index
    %c0_4 = arith.constant 0 : index
    %2 = vector.load %arg6[%c0_3, %c0_4] : memref<32x4xf32, #tpu.memory_space<vmem>>, vector<32x4xf32>
    %c0_5 = arith.constant 0 : index
    %c0_6 = arith.constant 0 : index
    %3 = vector.load %arg3[%c0_5, %c0_6] : memref<1x64xf32, #tpu.memory_space<vmem>>, vector<1x64xf32>
    %c0_7 = arith.constant 0 : index
    %c0_8 = arith.constant 0 : index
    %4 = vector.load %arg5[%c0_7, %c0_8] : memref<1x32xf32, #tpu.memory_space<vmem>>, vector<1x32xf32>
    %c0_9 = arith.constant 0 : index
    %c0_10 = arith.constant 0 : index
    %5 = vector.load %arg7[%c0_9, %c0_10] : memref<1x4xf32, #tpu.memory_space<vmem>>, vector<1x4xf32>
    %c0_i32 = arith.constant 0 : i32
    %c3_i32 = arith.constant 3 : i32
    %6 = arith.addi %c0_i32, %c3_i32 : i32
    %c1_i32 = arith.constant 1 : i32
    scf.for %arg9 = %c0_i32 to %6 step %c1_i32  : i32 {
      %c128_i32 = arith.constant 128 : i32
      %7 = arith.muli %arg9, %c128_i32 : i32
      %8 = tpu.assume_multiple %7, 128 : i32
      %9 = arith.index_cast %8 : i32 to index
      %c0_12 = arith.constant 0 : index
      %10 = vector.load %arg1[%9, %c0_12] : memref<384x7xf32, #tpu.memory_space<vmem>>, vector<128x7xf32>
      %cst = arith.constant dense<0.000000e+00> : vector<128x64xf32>
      %11 = tpu.matmul %10, %0, %cst {dimension_numbers = #tpu.dot_dimension_numbers<[1], [0], [0], [1], [0, 0, 1, 1], [], []>} : vector<128x7xf32>, vector<7x64xf32>, vector<128x64xf32> -> vector<128x64xf32>
      %12 = vector.broadcast %3 : vector<1x64xf32> to vector<128x64xf32>
      %13 = arith.addf %11, %12 : vector<128x64xf32>
      %cst_13 = arith.constant 0.000000e+00 : f32
      %14 = vector.broadcast %cst_13 : f32 to vector<128x64xf32>
      %15 = arith.maximumf %13, %14 : vector<128x64xf32>
      %cst_14 = arith.constant dense<0.000000e+00> : vector<128x32xf32>
      %16 = tpu.matmul %15, %1, %cst_14 {dimension_numbers = #tpu.dot_dimension_numbers<[1], [0], [0], [1], [0, 0, 1, 1], [], []>} : vector<128x64xf32>, vector<64x32xf32>, vector<128x32xf32> -> vector<128x32xf32>
      %17 = vector.broadcast %4 : vector<1x32xf32> to vector<128x32xf32>
      %18 = arith.addf %16, %17 : vector<128x32xf32>
      %cst_15 = arith.constant 0.000000e+00 : f32
      %19 = vector.broadcast %cst_15 : f32 to vector<128x32xf32>
      %20 = arith.maximumf %18, %19 : vector<128x32xf32>
      %cst_16 = arith.constant dense<0.000000e+00> : vector<128x4xf32>
      %21 = tpu.matmul %20, %2, %cst_16 {dimension_numbers = #tpu.dot_dimension_numbers<[1], [0], [0], [1], [0, 0, 1, 1], [], []>} : vector<128x32xf32>, vector<32x4xf32>, vector<128x4xf32> -> vector<128x4xf32>
      %22 = vector.broadcast %5 : vector<1x4xf32> to vector<128x4xf32>
      %23 = arith.addf %21, %22 : vector<128x4xf32>
      %24 = arith.index_cast %8 : i32 to index
      %c0_17 = arith.constant 0 : index
      %25 = vector.load %arg8[%24, %c0_17] : memref<384x4xf32, #tpu.memory_space<vmem>>, vector<128x4xf32>
      tpu.vector_store %arg8[%24, %c0_17], %23 {strides = array<i32>} : memref<384x4xf32, #tpu.memory_space<vmem>>, vector<128x4xf32>,
    }
    %c3_i32_11 = arith.constant 3 : i32
    return
  }
  func.func @transform_0(%arg0: i32) -> (i32, i32) {
    %c0_i32 = arith.constant 0 : i32
    %c0_i32_0 = arith.constant 0 : i32
    return %arg0, %c0_i32 : i32, i32
  }
  func.func @transform_1(%arg0: i32) -> (i32, i32) {
    %c0_i32 = arith.constant 0 : i32
    %c0_i32_0 = arith.constant 0 : i32
    %c0_i32_1 = arith.constant 0 : i32
    return %c0_i32, %c0_i32_0 : i32, i32
  }
  func.func @transform_2(%arg0: i32) -> (i32, i32) {
    %c0_i32 = arith.constant 0 : i32
    %c0_i32_0 = arith.constant 0 : i32
    %c0_i32_1 = arith.constant 0 : i32
    return %c0_i32, %c0_i32_0 : i32, i32
  }
  func.func @transform_3(%arg0: i32) -> (i32, i32) {
    %c0_i32 = arith.constant 0 : i32
    %c0_i32_0 = arith.constant 0 : i32
    %c0_i32_1 = arith.constant 0 : i32
    return %c0_i32, %c0_i32_0 : i32, i32
  }
  func.func @transform_4(%arg0: i32) -> (i32, i32) {
    %c0_i32 = arith.constant 0 : i32
    %c0_i32_0 = arith.constant 0 : i32
    %c0_i32_1 = arith.constant 0 : i32
    return %c0_i32, %c0_i32_0 : i32, i32
  }
  func.func @transform_5(%arg0: i32) -> (i32, i32) {
    %c0_i32 = arith.constant 0 : i32
    %c0_i32_0 = arith.constant 0 : i32
    %c0_i32_1 = arith.constant 0 : i32
    return %c0_i32, %c0_i32_0 : i32, i32
  }
  func.func @transform_6(%arg0: i32) -> (i32, i32) {
    %c0_i32 = arith.constant 0 : i32
    %c0_i32_0 = arith.constant 0 : i32
    %c0_i32_1 = arith.constant 0 : i32
    return %c0_i32, %c0_i32_0 : i32, i32
  }
  func.func @transform_7(%arg0: i32) -> (i32, i32) {
    %c0_i32 = arith.constant 0 : i32
    %c0_i32_0 = arith.constant 0 : i32
    return %arg0, %c0_i32 : i32, i32
  }
}

</mosaic_0001>

<llo_original>
// kernel: fnn_online_forward.1
$region0: #{fnn_online_forward.1}
  #allocation0 [shape = 'u32[]', space=smem, size = 0x4, offset = 0x4, fixed_abs, tag = 'smem constant byte address 0x4 - core index']
  #allocation1 [shape = 'u32[144,128]{1,0:T(1,128)}', space=vmem, size = 0x12000, scoped, tag = 'internal scratch']
  %s0 = inlined_call_operand.vmem [shape: f32[768,7], index: 0, kind: input, shape index: {}]
  %s1 = inlined_call_operand.vmem [shape: f32[7,64], index: 1, kind: input, shape index: {}]
  %s2 = inlined_call_operand.vmem [shape: f32[1,64], index: 2, kind: input, shape index: {}]
  %s3 = inlined_call_operand.vmem [shape: f32[64,32], index: 3, kind: input, shape index: {}]
  %s4 = inlined_call_operand.vmem [shape: f32[1,32], index: 4, kind: input, shape index: {}]
  %s5 = inlined_call_operand.vmem [shape: f32[32,4], index: 5, kind: input, shape index: {}]
  %s6 = inlined_call_operand.vmem [shape: f32[1,4], index: 6, kind: input, shape index: {}]
  %s7 = inlined_call_operand.vmem [shape: f32[768,4], index: 7, kind: output, shape index: {}]
  %s8 = sld [smem:[#allocation0]]
  $region68: #{fnn_online_forward.1} parent=0
    _
  %s10 = ssub.s32 1, %s8
  %s11 = scalar_select 0, %s10, %s8
  loop: start=0, step=1, limit=4
  $region2: #{fnn_online_forward.1} parent=0 // loop_pre_header
    _
  $region3: #{fnn_online_forward.1} parent=0 // loop_header
    %s13 = sphi 0, %s17
    %p14 = scmp.ge.s32.totalorder %s13, 4
    %s23 = sphi 0, %s25
    %s26 = sphi 0, %s23
    %s27 = sphi 0, %s26
    %s43 = sphi 0, %s27
    %s47 = sphi 0, %s47
    %s49 = sphi 0, %s47
    %s50 = sphi 0, %s49
    %s64 = sphi 0, %s50
    %s68 = sphi 0, %s68
    %s70 = sphi 0, %s68
    %s71 = sphi 0, %s70
    %s85 = sphi 0, %s71
    %s89 = sphi 0, %s89
    %s91 = sphi 0, %s89
    %s92 = sphi 0, %s91
    %s106 = sphi 0, %s92
    %s110 = sphi 0, %s110
    %s112 = sphi 0, %s110
    %s113 = sphi 0, %s112
    %s127 = sphi 0, %s113
    %s131 = sphi 0, %s131
    %s133 = sphi 0, %s131
    %s134 = sphi 0, %s133
    %s148 = sphi 0, %s134
    %s152 = sphi 0, %s152
    %s154 = sphi 0, %s152
    %s155 = sphi 0, %s154
    %s169 = sphi 0, %s155
    %s175 = sphi 0, %s177
    %s178 = sphi 0, %s175
    %s179 = sphi 0, %s178
    %s195 = sphi 0, %s179
  $region4: #{fnn_online_forward.1} parent=0 // loop_header_branch
    %16 = sbr.rel (%p14) target = $region8
  $region5: #{fnn_online_forward.1} parent=0 // loop_body
    %s18 = ssub.s32 %s13, 1
    %s19 = ssub.s32 %s13, 2
    %s20 = sadd.s32 %s13, 1
    %s21 = ssub.s32 %s13, %s20
    %p22 = scmp.eq.s32.totalorder %s21, 0
    %s24 = sadd.s32 %s23, 1
    %s25 = scalar_select %p22, %s23, %s24
    %p28 = pneg %p22
    %p29 = scmp.eq.s32.totalorder %s13, 1
    %p30 = por %p28, %p29
    %p31 = scmp.ne.s32.totalorder %s23, %s26
    %p32 = scmp.eq.s32.totalorder %s13, 0
    %p33 = por %p31, %p32
    %p34 = scmp.ne.s32.totalorder %s23, %s26
    %p35 = scmp.eq.s32.totalorder %s18, 1
    %p36 = por %p34, %p35
    %p37 = scmp.ne.s32.totalorder %s26, %s27
    %p38 = scmp.eq.s32.totalorder %s18, 0
    %p39 = por %p37, %p38
    %p40 = scmp.ne.s32.totalorder %s26, %s27
    %p41 = scmp.eq.s32.totalorder %s19, 1
    %p42 = por %p40, %p41
    %p44 = scmp.ne.s32.totalorder %s27, %s43
    %p45 = scmp.eq.s32.totalorder %s19, 0
    %p46 = por %p44, %p45
    %s48 = sadd.s32 %s47, 1
    %p51 = scmp.eq.s32.totalorder %s13, 1
    %p52 = scmp.ne.s32.totalorder %s47, %s49
    %p53 = scmp.eq.s32.totalorder %s13, 0
    %p54 = por %p52, %p53
    %p55 = scmp.ne.s32.totalorder %s47, %s49
    %p56 = scmp.eq.s32.totalorder %s18, 1
    %p57 = por %p55, %p56
    %p58 = scmp.ne.s32.totalorder %s49, %s50
    %p59 = scmp.eq.s32.totalorder %s18, 0
    %p60 = por %p58, %p59
    %p61 = scmp.ne.s32.totalorder %s49, %s50
    %p62 = scmp.eq.s32.totalorder %s19, 1
    %p63 = por %p61, %p62
    %p65 = scmp.ne.s32.totalorder %s50, %s64
    %p66 = scmp.eq.s32.totalorder %s19, 0
    %p67 = por %p65, %p66
    %s69 = sadd.s32 %s68, 1
    %p72 = scmp.eq.s32.totalorder %s13, 1
    %p73 = scmp.ne.s32.totalorder %s68, %s70
    %p74 = scmp.eq.s32.totalorder %s13, 0
    %p75 = por %p73, %p74
    %p76 = scmp.ne.s32.totalorder %s68, %s70
    %p77 = scmp.eq.s32.totalorder %s18, 1
    %p78 = por %p76, %p77
    %p79 = scmp.ne.s32.totalorder %s70, %s71
    %p80 = scmp.eq.s32.totalorder %s18, 0
    %p81 = por %p79, %p80
    %p82 = scmp.ne.s32.totalorder %s70, %s71
    %p83 = scmp.eq.s32.totalorder %s19, 1
    %p84 = por %p82, %p83
    %p86 = scmp.ne.s32.totalorder %s71, %s85
    %p87 = scmp.eq.s32.totalorder %s19, 0
    %p88 = por %p86, %p87
    %s90 = sadd.s32 %s89, 1
    %p93 = scmp.eq.s32.totalorder %s13, 1
    %p94 = scmp.ne.s32.totalorder %s89, %s91
    %p95 = scmp.eq.s32.totalorder %s13, 0
    %p96 = por %p94, %p95
    %p97 = scmp.ne.s32.totalorder %s89, %s91
    %p98 = scmp.eq.s32.totalorder %s18, 1
    %p99 = por %p97, %p98
    %p100 = scmp.ne.s32.totalorder %s91, %s92
    %p101 = scmp.eq.s32.totalorder %s18, 0
    %p102 = por %p100, %p101
    %p103 = scmp.ne.s32.totalorder %s91, %s92
    %p104 = scmp.eq.s32.totalorder %s19, 1
    %p105 = por %p103, %p104
    %p107 = scmp.ne.s32.totalorder %s92, %s106
    %p108 = scmp.eq.s32.totalorder %s19, 0
    %p109 = por %p107, %p108
    %s111 = sadd.s32 %s110, 1
    %p114 = scmp.eq.s32.totalorder %s13, 1
    %p115 = scmp.ne.s32.totalorder %s110, %s112
    %p116 = scmp.eq.s32.totalorder %s13, 0
    %p117 = por %p115, %p116
    %p118 = scmp.ne.s32.totalorder %s110, %s112
    %p119 = scmp.eq.s32.totalorder %s18, 1
    %p120 = por %p118, %p119
    %p121 = scmp.ne.s32.totalorder %s112, %s113
    %p122 = scmp.eq.s32.totalorder %s18, 0
    %p123 = por %p121, %p122
    %p124 = scmp.ne.s32.totalorder %s112, %s113
    %p125 = scmp.eq.s32.totalorder %s19, 1
    %p126 = por %p124, %p125
    %p128 = scmp.ne.s32.totalorder %s113, %s127
    %p129 = scmp.eq.s32.totalorder %s19, 0
    %p130 = por %p128, %p129
    %s132 = sadd.s32 %s131, 1
    %p135 = scmp.eq.s32.totalorder %s13, 1
    %p136 = scmp.ne.s32.totalorder %s131, %s133
    %p137 = scmp.eq.s32.totalorder %s13, 0
    %p138 = por %p136, %p137
    %p139 = scmp.ne.s32.totalorder %s131, %s133
    %p140 = scmp.eq.s32.totalorder %s18, 1
    %p141 = por %p139, %p140
    %p142 = scmp.ne.s32.totalorder %s133, %s134
    %p143 = scmp.eq.s32.totalorder %s18, 0
    %p144 = por %p142, %p143
    %p145 = scmp.ne.s32.totalorder %s133, %s134
    %p146 = scmp.eq.s32.totalorder %s19, 1
    %p147 = por %p145, %p146
    %p149 = scmp.ne.s32.totalorder %s134, %s148
    %p150 = scmp.eq.s32.totalorder %s19, 0
    %p151 = por %p149, %p150
    %s153 = sadd.s32 %s152, 1
    %p156 = scmp.eq.s32.totalorder %s13, 1
    %p157 = scmp.ne.s32.totalorder %s152, %s154
    %p158 = scmp.eq.s32.totalorder %s13, 0
    %p159 = por %p157, %p158
    %p160 = scmp.ne.s32.totalorder %s152, %s154
    %p161 = scmp.eq.s32.totalorder %s18, 1
    %p162 = por %p160, %p161
    %p163 = scmp.ne.s32.totalorder %s154, %s155
    %p164 = scmp.eq.s32.totalorder %s18, 0
    %p165 = por %p163, %p164
    %p166 = scmp.ne.s32.totalorder %s154, %s155
    %p167 = scmp.eq.s32.totalorder %s19, 1
    %p168 = por %p166, %p167
    %p170 = scmp.ne.s32.totalorder %s155, %s169
    %p171 = scmp.eq.s32.totalorder %s19, 0
    %p172 = por %p170, %p171
    %s173 = ssub.s32 %s13, %s20
    %p174 = scmp.eq.s32.totalorder %s173, 0
    %s176 = sadd.s32 %s175, 1
    %s177 = scalar_select %p174, %s175, %s176
    %p180 = pneg %p174
    %p181 = scmp.eq.s32.totalorder %s13, 1
    %p182 = por %p180, %p181
    %p183 = scmp.ne.s32.totalorder %s175, %s178
    %p184 = scmp.eq.s32.totalorder %s13, 0
    %p185 = por %p183, %p184
    %p186 = scmp.ne.s32.totalorder %s175, %s178
    %p187 = scmp.eq.s32.totalorder %s18, 1
    %p188 = por %p186, %p187
    %p189 = scmp.ne.s32.totalorder %s178, %s179
    %p190 = scmp.eq.s32.totalorder %s18, 0
    %p191 = por %p189, %p190
    %p192 = scmp.ne.s32.totalorder %s178, %s179
    %p193 = scmp.eq.s32.totalorder %s19, 1
    %p194 = por %p192, %p193
    %p196 = scmp.ne.s32.totalorder %s179, %s195
    %p197 = scmp.eq.s32.totalorder %s19, 0
    %p198 = por %p196, %p197
    %p199 = scmp.le.s32.totalorder 1, %s13
    %p200 = scmp.lt.s32.totalorder %s13, 3
    %p201 = pnand %p199, %p200
    %p202 = pneg %p201
    // Predicated region
    $region9: #{fnn_online_forward.1} parent=5 // pred_check
      _
    $region10: #{fnn_online_forward.1} parent=5 // pred_check_branch
      %204 = sbr.rel (%p201) target = $region12
    $region11: #{fnn_online_forward.1} parent=5 // pred_region
      %s205 = ssub.s32 %s13, 1
      // Predicated region
      $region13: #{fnn_online_forward.1} parent=11 // pred_check
        %p206 = pneg %p60
      $region14: #{fnn_online_forward.1} parent=11 // pred_check_branch
        %208 = sbr.rel (%p206) target = $region16
      $region15: #{fnn_online_forward.1} parent=11 // pred_region
        _
      $region16: #{fnn_online_forward.1} parent=11 // pred_fallthru
        _
      // Predicated region
      $region17: #{fnn_online_forward.1} parent=11 // pred_check
        %p209 = pneg %p81
      $region18: #{fnn_online_forward.1} parent=11 // pred_check_branch
        %211 = sbr.rel (%p209) target = $region20
      $region19: #{fnn_online_forward.1} parent=11 // pred_region
        _
      $region20: #{fnn_online_forward.1} parent=11 // pred_fallthru
        _
      // Predicated region
      $region21: #{fnn_online_forward.1} parent=11 // pred_check
        %p212 = pneg %p102
      $region22: #{fnn_online_forward.1} parent=11 // pred_check_branch
        %214 = sbr.rel (%p212) target = $region24
      $region23: #{fnn_online_forward.1} parent=11 // pred_region
        _
      $region24: #{fnn_online_forward.1} parent=11 // pred_fallthru
        _
      // Predicated region
      $region25: #{fnn_online_forward.1} parent=11 // pred_check
        %p215 = pneg %p123
      $region26: #{fnn_online_forward.1} parent=11 // pred_check_branch
        %217 = sbr.rel (%p215) target = $region28
      $region27: #{fnn_online_forward.1} parent=11 // pred_region
        _
      $region28: #{fnn_online_forward.1} parent=11 // pred_fallthru
        _
      // Predicated region
      $region29: #{fnn_online_forward.1} parent=11 // pred_check
        %p218 = pneg %p144
      $region30: #{fnn_online_forward.1} parent=11 // pred_check_branch
        %220 = sbr.rel (%p218) target = $region32
      $region31: #{fnn_online_forward.1} parent=11 // pred_region
        _
      $region32: #{fnn_online_forward.1} parent=11 // pred_fallthru
        _
      // Predicated region
      $region33: #{fnn_online_forward.1} parent=11 // pred_check
        %p221 = pneg %p165
      $region34: #{fnn_online_forward.1} parent=11 // pred_check_branch
        %223 = sbr.rel (%p221) target = $region36
      $region35: #{fnn_online_forward.1} parent=11 // pred_region
        _
      $region36: #{fnn_online_forward.1} parent=11 // pred_fallthru
        _
    $region12: #{fnn_online_forward.1} parent=5 // pred_fallthru
      _
    %p224 = scmp.lt.s32.totalorder %s13, 2
    // Predicated region
    $region37: #{fnn_online_forward.1} parent=5 // pred_check
      %p225 = pneg %p224
    $region38: #{fnn_online_forward.1} parent=5 // pred_check_branch
      %227 = sbr.rel (%p225) target = $region40
    $region39: #{fnn_online_forward.1} parent=5 // pred_region
      // Predicated region
      $region41: #{fnn_online_forward.1} parent=39 // pred_check
        %p228 = pneg %p33
      $region42: #{fnn_online_forward.1} parent=39 // pred_check_branch
        %230 = sbr.rel (%p228) target = $region44
      $region43: #{fnn_online_forward.1} parent=39 // pred_region
        %s231 = smul.u32 48, %s13
        %p232 = scmp.lt.s32.totalorder %s231, 95
        %s233 = scalar_select %p232, %s231, 95
        %s234 = smul.addr %s233, 8
        %s235 = scalar_lea.vmem %s0, %s234
        %s236 = smul.u32 48, %s13
      $region44: #{fnn_online_forward.1} parent=39 // pred_fallthru
        _
    $region40: #{fnn_online_forward.1} parent=5 // pred_fallthru
      _
    %p237 = scmp.le.s32.totalorder 1, %s13
    %p238 = scmp.lt.s32.totalorder %s13, 3
    %p239 = pnand %p237, %p238
    %p240 = pneg %p239
    // Predicated region
    $region45: #{fnn_online_forward.1} parent=5 // pred_check
      _
    $region46: #{fnn_online_forward.1} parent=5 // pred_check_branch
      %242 = sbr.rel (%p239) target = $region48
    $region47: #{fnn_online_forward.1} parent=5 // pred_region
      %s243 = ssub.s32 %s13, 1
      %s244 = smul.u32 48, %s18
      %p245 = scmp.lt.s32.totalorder %s244, 95
      %s246 = scalar_select %p245, %s244, 95
      %s247 = smul.addr %s246, 8
      %s248 = scalar_lea.vmem %s0, %s247
      %p249 = pneg %p39
      %p250 = pneg %p36
      %p251 = pneg %p60
      %p252 = pneg %p57
      %p253 = pneg %p81
      %p254 = pneg %p78
      %p255 = pneg %p102
      %p256 = pneg %p99
      %p257 = pneg %p123
      %p258 = pneg %p120
      %p259 = pneg %p144
      %p260 = pneg %p141
      %p261 = pneg %p165
      %p262 = pneg %p162
      %p263 = pneg %p191
      %p264 = pneg %p188
      %s265 = smul.u32 48, %s18
      %p266 = scmp.lt.s32.totalorder %s265, 95
      %s267 = scalar_select %p266, %s265, 95
      %s268 = smul.addr %s267, 8
      %s269 = scalar_lea.vmem %s7, %s268
      %s270 = smul.u32 48, %s18
      %p271 = scmp.lt.s32.totalorder %s270, 95
      %s272 = scalar_select %p271, %s270, 95
      %s273 = smul.addr %s272, 8
      %s274 = scalar_lea.vmem %s0, %s273
      %s275 = smul.u32 48, %s18
      %s276 = smul.u32 48, %s18
      %p277 = scmp.lt.s32.totalorder %s276, 95
      %s278 = scalar_select %p277, %s276, 95
      %s279 = smul.addr %s278, 8
      %s280 = scalar_lea.vmem %s7, %s279
      %s281 = smul.u32 48, %s18
      %v282 = vld [vmem:[%s1] sm:$0x7f]
      %v283 = vld [vmem:[%s3] sm:$0xff]
      %v284 = vld [vmem:[%s3 + $0x8] sm:$0xff]
      %v285 = vld [vmem:[%s3 + $0x10] sm:$0xff]
      %v286 = vld [vmem:[%s3 + $0x18] sm:$0xff]
      %v287 = vld [vmem:[%s3 + $0x20] sm:$0xff]
      %v288 = vld [vmem:[%s3 + $0x28] sm:$0xff]
      %v289 = vld [vmem:[%s3 + $0x30] sm:$0xff]
      %v290 = vld [vmem:[%s3 + $0x38] sm:$0xff]
      %v291 = vld [vmem:[%s5] sm:$0xff]
      %v292 = vld [vmem:[%s5 + $0x8] sm:$0xff]
      %v293 = vld [vmem:[%s5 + $0x10] sm:$0xff]
      %v294 = vld [vmem:[%s5 + $0x18] sm:$0xff]
      %v295 = vld [vmem:[%s2] sm:$0x1]
      %v296 = vld [vmem:[%s4] sm:$0x1]
      %v297 = vld [vmem:[%s6] sm:$0x1]
      loop: start=0, step=1, limit=3
      $region49: #{fnn_online_forward.1} parent=47 // loop_pre_header
        _
      $region50: #{fnn_online_forward.1} parent=47 // loop_header
        %s299 = sphi 0, %s303
        %p300 = scmp.ge.s32.totalorder %s299, 3
      $region51: #{fnn_online_forward.1} parent=47 // loop_header_branch
        %302 = sbr.rel (%p300) target = $region55
      $region52: #{fnn_online_forward.1} parent=47 // loop_body
        %s304 = smul.u32 %s299, 128
        %s305 = scalar_lea.vmem %s274, %s304
        %v306 = vld [vmem:[%s305] sm:$0xff]
        %v307 = vld [vmem:[%s305 + $0x8] sm:$0xff]
        %v308 = vld [vmem:[%s305 + $0x10] sm:$0xff]
        %v309 = vld [vmem:[%s305 + $0x18] sm:$0xff]
        %v310 = vld [vmem:[%s305 + $0x20] sm:$0xff]
        %v311 = vld [vmem:[%s305 + $0x28] sm:$0xff]
        %v312 = vld [vmem:[%s305 + $0x30] sm:$0xff]
        %v313 = vld [vmem:[%s305 + $0x38] sm:$0xff]
        %v314 = vld [vmem:[%s305 + $0x40] sm:$0xff]
        %v315 = vld [vmem:[%s305 + $0x48] sm:$0xff]
        %v316 = vld [vmem:[%s305 + $0x50] sm:$0xff]
        %v317 = vld [vmem:[%s305 + $0x58] sm:$0xff]
        %v318 = vld [vmem:[%s305 + $0x60] sm:$0xff]
        %v319 = vld [vmem:[%s305 + $0x68] sm:$0xff]
        %v320 = vld [vmem:[%s305 + $0x70] sm:$0xff]
        %v321 = vld [vmem:[%s305 + $0x78] sm:$0xff]
        %v323 = vlaneseq
        %v324 = vshrl.u32 %v323, 7
        %v325 = vsub.s32 0, %v324
        %v326 = vrot.slane %v295, %v325
        %vm328 = vcmask 56320
        %v330 = vsel %vm328, %v306, 0
        %v333 = vsel %vm328, %v307, 0
        %v336 = vsel %vm328, %v308, 0
        %v339 = vsel %vm328, %v309, 0
        %v342 = vsel %vm328, %v310, 0
        %v345 = vsel %vm328, %v311, 0
        %v348 = vsel %vm328, %v312, 0
        %v351 = vsel %vm328, %v313, 0
        %v354 = vsel %vm328, %v314, 0
        %v357 = vsel %vm328, %v315, 0
        %v360 = vsel %vm328, %v316, 0
        %v363 = vsel %vm328, %v317, 0
        %v366 = vsel %vm328, %v318, 0
        %v369 = vsel %vm328, %v319, 0
        %v372 = vsel %vm328, %v320, 0
        %v375 = vsel %vm328, %v321, 0
        %vm377 = vcmask 1046528
        %v379 = vsel %vm377, %v282, 0
        %381 = vmatprep.subr.mxu0 0.0
        %382 = vmatpush1.msra.mxu0 %v379
        %383 = vmatprep.subr.mxu0 0.0
        %384 = vmatpush1.msra.mxu0 0.0
        %385 = vmatprep.subr.mxu0 0.0
        %386 = vmatpush1.msra.mxu0 0.0
        %387 = vmatprep.subr.mxu0 0.0
        %388 = vmatpush1.msra.mxu0 0.0
        %389 = vmatprep.subr.mxu0 0.0
        %390 = vmatpush1.msra.mxu0 0.0
        %391 = vmatprep.subr.mxu0 0.0
        %392 = vmatpush1.msra.mxu0 0.0
        %393 = vmatprep.subr.mxu0 0.0
        %394 = vmatpush1.msra.mxu0 0.0
        %395 = vmatprep.subr.mxu0 0.0
        %396 = vmatpush1.msra.mxu0 0.0
        %397 = vmatprep.subr.mxu0 0.0
        %398 = vmatpush1.msra.mxu0 0.0
        %399 = vmatprep.subr.mxu0 0.0
        %400 = vmatpush1.msra.mxu0 0.0
        %401 = vmatprep.subr.mxu0 0.0
        %402 = vmatpush1.msra.mxu0 0.0
        %403 = vmatprep.subr.mxu0 0.0
        %404 = vmatpush1.msra.mxu0 0.0
        %405 = vmatprep.subr.mxu0 0.0
        %406 = vmatpush1.msra.mxu0 0.0
        %407 = vmatprep.subr.mxu0 0.0
        %408 = vmatpush1.msra.mxu0 0.0
        %409 = vmatprep.subr.mxu0 0.0
        %410 = vmatpush1.msra.mxu0 0.0
        %411 = vmatprep.subr.mxu0 0.0
        %412 = vmatpush1.msra.mxu0 0.0
        %413 = vmatprep.subr.mxu0 0.0
        %414 = vmatpush1.msra.mxu0 0.0
        %415 = vmatprep.subr.mxu0 0.0
        %416 = vmatpush1.msra.mxu0 0.0
        %417 = vmatprep.subr.mxu0 0.0
        %418 = vmatpush1.msra.mxu0 0.0
        %419 = vmatprep.subr.mxu0 0.0
        %420 = vmatpush1.msra.mxu0 0.0
        %421 = vmatprep.subr.mxu0 0.0
        %422 = vmatpush1.msra.mxu0 0.0
        %423 = vmatprep.subr.mxu0 0.0
        %424 = vmatpush1.msra.mxu0 0.0
        %425 = vmatprep.subr.mxu0 0.0
        %426 = vmatpush1.msra.mxu0 0.0
        %427 = vmatprep.subr.mxu0 0.0
        %428 = vmatpush1.msra.mxu0 0.0
        %429 = vmatprep.subr.mxu0 0.0
        %430 = vmatpush1.msra.mxu0 0.0
        %431 = vmatprep.subr.mxu0 0.0
        %432 = vmatpush1.msra.mxu0 0.0
        %433 = vmatprep.subr.mxu0 0.0
        %434 = vmatpush1.msra.mxu0 0.0
        %435 = vmatprep.subr.mxu0 0.0
        %436 = vmatpush1.msra.mxu0 0.0
        %437 = vmatprep.subr.mxu0 0.0
        %438 = vmatpush1.msra.mxu0 0.0
        %439 = vmatprep.subr.mxu0 0.0
        %440 = vmatpush1.msra.mxu0 0.0
        %441 = vmatprep.subr.mxu0 0.0
        %442 = vmatpush1.msra.mxu0 0.0
        %443 = vmatprep.subr.mxu0 0.0
        %444 = vmatpush1.msra.mxu0 0.0
        %445 = vmatprep.mubr.f32.mxu0 0.0
        %446 = vmatmul.mubr.f32.gmra.mrb[0].mxu0 %v330
        %v447 = vpop.f32.mrb[0].mxu0
        %v448 = vadd.f32 %v326, %v447
        %v449 = vpop.f32.mrb[0].mxu0
        %450 = vmatprep.mubr.f32.mxu0 0.0
        %451 = vmatmul.mubr.f32.gmra.mrb[0].mxu0 %v333
        %v452 = vpop.f32.mrb[0].mxu0
        %v453 = vadd.f32 %v326, %v452
        %v454 = vpop.f32.mrb[0].mxu0
        %455 = vmatprep.mubr.f32.mxu0 0.0
        %456 = vmatmul.mubr.f32.gmra.mrb[0].mxu0 %v336
        %v457 = vpop.f32.mrb[0].mxu0
        %v458 = vadd.f32 %v326, %v457
        %v459 = vpop.f32.mrb[0].mxu0
        %460 = vmatprep.mubr.f32.mxu0 0.0
        %461 = vmatmul.mubr.f32.gmra.mrb[0].mxu0 %v339
        %v462 = vpop.f32.mrb[0].mxu0
        %v463 = vadd.f32 %v326, %v462
        %v464 = vpop.f32.mrb[0].mxu0
        %465 = vmatprep.mubr.f32.mxu0 0.0
        %466 = vmatmul.mubr.f32.gmra.mrb[0].mxu0 %v342
        %v467 = vpop.f32.mrb[0].mxu0
        %v468 = vadd.f32 %v326, %v467
        %v469 = vpop.f32.mrb[0].mxu0
        %470 = vmatprep.mubr.f32.mxu0 0.0
        %471 = vmatmul.mubr.f32.gmra.mrb[0].mxu0 %v345
        %v472 = vpop.f32.mrb[0].mxu0
        %v473 = vadd.f32 %v326, %v472
        %v474 = vpop.f32.mrb[0].mxu0
        %475 = vmatprep.mubr.f32.mxu0 0.0
        %476 = vmatmul.mubr.f32.gmra.mrb[0].mxu0 %v348
        %v477 = vpop.f32.mrb[0].mxu0
        %v478 = vadd.f32 %v326, %v477
        %v479 = vpop.f32.mrb[0].mxu0
        %480 = vmatprep.mubr.f32.mxu0 0.0
        %481 = vmatmul.mubr.f32.gmra.mrb[0].mxu0 %v351
        %v482 = vpop.f32.mrb[0].mxu0
        %v483 = vadd.f32 %v326, %v482
        %v484 = vpop.f32.mrb[0].mxu0
        %485 = vmatprep.mubr.f32.mxu0 0.0
        %486 = vmatmul.mubr.f32.gmra.mrb[0].mxu0 %v354
        %v487 = vpop.f32.mrb[0].mxu0
        %v488 = vadd.f32 %v326, %v487
        %v489 = vpop.f32.mrb[0].mxu0
        %490 = vmatprep.mubr.f32.mxu0 0.0
        %491 = vmatmul.mubr.f32.gmra.mrb[0].mxu0 %v357
        %v492 = vpop.f32.mrb[0].mxu0
        %v493 = vadd.f32 %v326, %v492
        %v494 = vpop.f32.mrb[0].mxu0
        %495 = vmatprep.mubr.f32.mxu0 0.0
        %496 = vmatmul.mubr.f32.gmra.mrb[0].mxu0 %v360
        %v497 = vpop.f32.mrb[0].mxu0
        %v498 = vadd.f32 %v326, %v497
        %v499 = vpop.f32.mrb[0].mxu0
        %500 = vmatprep.mubr.f32.mxu0 0.0
        %501 = vmatmul.mubr.f32.gmra.mrb[0].mxu0 %v363
        %v502 = vpop.f32.mrb[0].mxu0
        %v503 = vadd.f32 %v326, %v502
        %v504 = vpop.f32.mrb[0].mxu0
        %505 = vmatprep.mubr.f32.mxu0 0.0
        %506 = vmatmul.mubr.f32.gmra.mrb[0].mxu0 %v366
        %v507 = vpop.f32.mrb[0].mxu0
        %v508 = vadd.f32 %v326, %v507
        %v509 = vpop.f32.mrb[0].mxu0
        %510 = vmatprep.mubr.f32.mxu0 0.0
        %511 = vmatmul.mubr.f32.gmra.mrb[0].mxu0 %v369
        %v512 = vpop.f32.mrb[0].mxu0
        %v513 = vadd.f32 %v326, %v512
        %v514 = vpop.f32.mrb[0].mxu0
        %515 = vmatprep.mubr.f32.mxu0 0.0
        %516 = vmatmul.mubr.f32.gmra.mrb[0].mxu0 %v372
        %v517 = vpop.f32.mrb[0].mxu0
        %v518 = vadd.f32 %v326, %v517
        %v519 = vpop.f32.mrb[0].mxu0
        %520 = vmatprep.mubr.f32.mxu0 0.0
        %521 = vmatmul.mubr.f32.gmra.mrb[0].mxu0 %v375
        %v522 = vpop.f32.mrb[0].mxu0
        %v523 = vadd.f32 %v326, %v522
        %v524 = vpop.f32.mrb[0].mxu0
        %525 = vdwg.mxu0
        %v526 = vmax.f32 %v448, 0.0
        %v527 = vmax.f32 %v453, 0.0
        %v528 = vmax.f32 %v458, 0.0
        %v529 = vmax.f32 %v463, 0.0
        %v530 = vmax.f32 %v468, 0.0
        %v531 = vmax.f32 %v473, 0.0
        %v532 = vmax.f32 %v478, 0.0
        %v533 = vmax.f32 %v483, 0.0
        %v534 = vmax.f32 %v488, 0.0
        %v535 = vmax.f32 %v493, 0.0
        %v536 = vmax.f32 %v498, 0.0
        %v537 = vmax.f32 %v503, 0.0
        %v538 = vmax.f32 %v508, 0.0
        %v539 = vmax.f32 %v513, 0.0
        %v540 = vmax.f32 %v518, 0.0
        %v541 = vmax.f32 %v523, 0.0
        %v543 = vlaneseq
        %v544 = vshrl.u32 %v543, 7
        %v545 = vsub.s32 0, %v544
        %v546 = vrot.slane %v296, %v545
        %vm548 = vcmask 523264
        %v550 = vsel %vm548, %v526, 0
        %v553 = vsel %vm548, %v527, 0
        %v556 = vsel %vm548, %v528, 0
        %v559 = vsel %vm548, %v529, 0
        %v562 = vsel %vm548, %v530, 0
        %v565 = vsel %vm548, %v531, 0
        %v568 = vsel %vm548, %v532, 0
        %v571 = vsel %vm548, %v533, 0
        %v574 = vsel %vm548, %v534, 0
        %v577 = vsel %vm548, %v535, 0
        %v580 = vsel %vm548, %v536, 0
        %v583 = vsel %vm548, %v537, 0
        %v586 = vsel %vm548, %v538, 0
        %v589 = vsel %vm548, %v539, 0
        %v592 = vsel %vm548, %v540, 0
        %v595 = vsel %vm548, %v541, 0
        %597 = vmatprep.subr.mxu0 0.0
        %598 = vmatpush1.msra.mxu0 %v283
        %599 = vmatprep.subr.mxu0 0.0
        %600 = vmatpush1.msra.mxu0 %v284
        %601 = vmatprep.subr.mxu0 0.0
        %602 = vmatpush1.msra.mxu0 %v285
        %603 = vmatprep.subr.mxu0 0.0
        %604 = vmatpush1.msra.mxu0 %v286
        %605 = vmatprep.subr.mxu0 0.0
        %606 = vmatpush1.msra.mxu0 %v287
        %607 = vmatprep.subr.mxu0 0.0
        %608 = vmatpush1.msra.mxu0 %v288
        %609 = vmatprep.subr.mxu0 0.0
        %610 = vmatpush1.msra.mxu0 %v289
        %611 = vmatprep.subr.mxu0 0.0
        %612 = vmatpush1.msra.mxu0 %v290
        %613 = vmatprep.subr.mxu0 0.0
        %614 = vmatpush1.msra.mxu0 0.0
        %615 = vmatprep.subr.mxu0 0.0
        %616 = vmatpush1.msra.mxu0 0.0
        %617 = vmatprep.subr.mxu0 0.0
        %618 = vmatpush1.msra.mxu0 0.0
        %619 = vmatprep.subr.mxu0 0.0
        %620 = vmatpush1.msra.mxu0 0.0
        %621 = vmatprep.subr.mxu0 0.0
        %622 = vmatpush1.msra.mxu0 0.0
        %623 = vmatprep.subr.mxu0 0.0
        %624 = vmatpush1.msra.mxu0 0.0
        %625 = vmatprep.subr.mxu0 0.0
        %626 = vmatpush1.msra.mxu0 0.0
        %627 = vmatprep.subr.mxu0 0.0
        %628 = vmatpush1.msra.mxu0 0.0
        %629 = vmatprep.subr.mxu0 0.0
        %630 = vmatpush1.msra.mxu0 0.0
        %631 = vmatprep.subr.mxu0 0.0
        %632 = vmatpush1.msra.mxu0 0.0
        %633 = vmatprep.subr.mxu0 0.0
        %634 = vmatpush1.msra.mxu0 0.0
        %635 = vmatprep.subr.mxu0 0.0
        %636 = vmatpush1.msra.mxu0 0.0
        %637 = vmatprep.subr.mxu0 0.0
        %638 = vmatpush1.msra.mxu0 0.0
        %639 = vmatprep.subr.mxu0 0.0
        %640 = vmatpush1.msra.mxu0 0.0
        %641 = vmatprep.subr.mxu0 0.0
        %642 = vmatpush1.msra.mxu0 0.0
        %643 = vmatprep.subr.mxu0 0.0
        %644 = vmatpush1.msra.mxu0 0.0
        %645 = vmatprep.subr.mxu0 0.0
        %646 = vmatpush1.msra.mxu0 0.0
        %647 = vmatprep.subr.mxu0 0.0
        %648 = vmatpush1.msra.mxu0 0.0
        %649 = vmatprep.subr.mxu0 0.0
        %650 = vmatpush1.msra.mxu0 0.0
        %651 = vmatprep.subr.mxu0 0.0
        %652 = vmatpush1.msra.mxu0 0.0
        %653 = vmatprep.subr.mxu0 0.0
        %654 = vmatpush1.msra.mxu0 0.0
        %655 = vmatprep.subr.mxu0 0.0
        %656 = vmatpush1.msra.mxu0 0.0
        %657 = vmatprep.subr.mxu0 0.0
        %658 = vmatpush1.msra.mxu0 0.0
        %659 = vmatprep.subr.mxu0 0.0
        %660 = vmatpush1.msra.mxu0 0.0
        %661 = vmatprep.mubr.f32.mxu0 0.0
        %662 = vmatmul.mubr.f32.gmra.mrb[0].mxu0 %v550
        %v663 = vpop.f32.mrb[0].mxu0
        %v664 = vadd.f32 %v546, %v663
        %v665 = vpop.f32.mrb[0].mxu0
        %666 = vmatprep.mubr.f32.mxu0 0.0
        %667 = vmatmul.mubr.f32.gmra.mrb[0].mxu0 %v553
        %v668 = vpop.f32.mrb[0].mxu0
        %v669 = vadd.f32 %v546, %v668
        %v670 = vpop.f32.mrb[0].mxu0
        %671 = vmatprep.mubr.f32.mxu0 0.0
        %672 = vmatmul.mubr.f32.gmra.mrb[0].mxu0 %v556
        %v673 = vpop.f32.mrb[0].mxu0
        %v674 = vadd.f32 %v546, %v673
        %v675 = vpop.f32.mrb[0].mxu0
        %676 = vmatprep.mubr.f32.mxu0 0.0
        %677 = vmatmul.mubr.f32.gmra.mrb[0].mxu0 %v559
        %v678 = vpop.f32.mrb[0].mxu0
        %v679 = vadd.f32 %v546, %v678
        %v680 = vpop.f32.mrb[0].mxu0
        %681 = vmatprep.mubr.f32.mxu0 0.0
        %682 = vmatmul.mubr.f32.gmra.mrb[0].mxu0 %v562
        %v683 = vpop.f32.mrb[0].mxu0
        %v684 = vadd.f32 %v546, %v683
        %v685 = vpop.f32.mrb[0].mxu0
        %686 = vmatprep.mubr.f32.mxu0 0.0
        %687 = vmatmul.mubr.f32.gmra.mrb[0].mxu0 %v565
        %v688 = vpop.f32.mrb[0].mxu0
        %v689 = vadd.f32 %v546, %v688
        %v690 = vpop.f32.mrb[0].mxu0
        %691 = vmatprep.mubr.f32.mxu0 0.0
        %692 = vmatmul.mubr.f32.gmra.mrb[0].mxu0 %v568
        %v693 = vpop.f32.mrb[0].mxu0
        %v694 = vadd.f32 %v546, %v693
        %v695 = vpop.f32.mrb[0].mxu0
        %696 = vmatprep.mubr.f32.mxu0 0.0
        %697 = vmatmul.mubr.f32.gmra.mrb[0].mxu0 %v571
        %v698 = vpop.f32.mrb[0].mxu0
        %v699 = vadd.f32 %v546, %v698
        %v700 = vpop.f32.mrb[0].mxu0
        %701 = vmatprep.mubr.f32.mxu0 0.0
        %702 = vmatmul.mubr.f32.gmra.mrb[0].mxu0 %v574
        %v703 = vpop.f32.mrb[0].mxu0
        %v704 = vadd.f32 %v546, %v703
        %v705 = vpop.f32.mrb[0].mxu0
        %706 = vmatprep.mubr.f32.mxu0 0.0
        %707 = vmatmul.mubr.f32.gmra.mrb[0].mxu0 %v577
        %v708 = vpop.f32.mrb[0].mxu0
        %v709 = vadd.f32 %v546, %v708
        %v710 = vpop.f32.mrb[0].mxu0
        %711 = vmatprep.mubr.f32.mxu0 0.0
        %712 = vmatmul.mubr.f32.gmra.mrb[0].mxu0 %v580
        %v713 = vpop.f32.mrb[0].mxu0
        %v714 = vadd.f32 %v546, %v713
        %v715 = vpop.f32.mrb[0].mxu0
        %716 = vmatprep.mubr.f32.mxu0 0.0
        %717 = vmatmul.mubr.f32.gmra.mrb[0].mxu0 %v583
        %v718 = vpop.f32.mrb[0].mxu0
        %v719 = vadd.f32 %v546, %v718
        %v720 = vpop.f32.mrb[0].mxu0
        %721 = vmatprep.mubr.f32.mxu0 0.0
        %722 = vmatmul.mubr.f32.gmra.mrb[0].mxu0 %v586
        %v723 = vpop.f32.mrb[0].mxu0
        %v724 = vadd.f32 %v546, %v723
        %v725 = vpop.f32.mrb[0].mxu0
        %726 = vmatprep.mubr.f32.mxu0 0.0
        %727 = vmatmul.mubr.f32.gmra.mrb[0].mxu0 %v589
        %v728 = vpop.f32.mrb[0].mxu0
        %v729 = vadd.f32 %v546, %v728
        %v730 = vpop.f32.mrb[0].mxu0
        %731 = vmatprep.mubr.f32.mxu0 0.0
        %732 = vmatmul.mubr.f32.gmra.mrb[0].mxu0 %v592
        %v733 = vpop.f32.mrb[0].mxu0
        %v734 = vadd.f32 %v546, %v733
        %v735 = vpop.f32.mrb[0].mxu0
        %736 = vmatprep.mubr.f32.mxu0 0.0
        %737 = vmatmul.mubr.f32.gmra.mrb[0].mxu0 %v595
        %v738 = vpop.f32.mrb[0].mxu0
        %v739 = vadd.f32 %v546, %v738
        %v740 = vpop.f32.mrb[0].mxu0
        %741 = vdwg.mxu0
        %v742 = vmax.f32 %v664, 0.0
        %v743 = vmax.f32 %v669, 0.0
        %v744 = vmax.f32 %v674, 0.0
        %v745 = vmax.f32 %v679, 0.0
        %v746 = vmax.f32 %v684, 0.0
        %v747 = vmax.f32 %v689, 0.0
        %v748 = vmax.f32 %v694, 0.0
        %v749 = vmax.f32 %v699, 0.0
        %v750 = vmax.f32 %v704, 0.0
        %v751 = vmax.f32 %v709, 0.0
        %v752 = vmax.f32 %v714, 0.0
        %v753 = vmax.f32 %v719, 0.0
        %v754 = vmax.f32 %v724, 0.0
        %v755 = vmax.f32 %v729, 0.0
        %v756 = vmax.f32 %v734, 0.0
        %v757 = vmax.f32 %v739, 0.0
        %v759 = vlaneseq
        %v760 = vshrl.u32 %v759, 7
        %v761 = vsub.s32 0, %v760
        %v762 = vrot.slane %v297, %v761
        %vm764 = vcmask 261120
        %v766 = vsel %vm764, %v742, 0
        %v769 = vsel %vm764, %v743, 0
        %v772 = vsel %vm764, %v744, 0
        %v775 = vsel %vm764, %v745, 0
        %v778 = vsel %vm764, %v746, 0
        %v781 = vsel %vm764, %v747, 0
        %v784 = vsel %vm764, %v748, 0
        %v787 = vsel %vm764, %v749, 0
        %v790 = vsel %vm764, %v750, 0
        %v793 = vsel %vm764, %v751, 0
        %v796 = vsel %vm764, %v752, 0
        %v799 = vsel %vm764, %v753, 0
        %v802 = vsel %vm764, %v754, 0
        %v805 = vsel %vm764, %v755, 0
        %v808 = vsel %vm764, %v756, 0
        %v811 = vsel %vm764, %v757, 0
        %813 = vmatprep.subr.mxu0 0.0
        %814 = vmatpush1.msra.mxu0 %v291
        %815 = vmatprep.subr.mxu0 0.0
        %816 = vmatpush1.msra.mxu0 %v292
        %817 = vmatprep.subr.mxu0 0.0
        %818 = vmatpush1.msra.mxu0 %v293
        %819 = vmatprep.subr.mxu0 0.0
        %820 = vmatpush1.msra.mxu0 %v294
        %821 = vmatprep.subr.mxu0 0.0
        %822 = vmatpush1.msra.mxu0 0.0
        %823 = vmatprep.subr.mxu0 0.0
        %824 = vmatpush1.msra.mxu0 0.0
        %825 = vmatprep.subr.mxu0 0.0
        %826 = vmatpush1.msra.mxu0 0.0
        %827 = vmatprep.subr.mxu0 0.0
        %828 = vmatpush1.msra.mxu0 0.0
        %829 = vmatprep.subr.mxu0 0.0
        %830 = vmatpush1.msra.mxu0 0.0
        %831 = vmatprep.subr.mxu0 0.0
        %832 = vmatpush1.msra.mxu0 0.0
        %833 = vmatprep.subr.mxu0 0.0
        %834 = vmatpush1.msra.mxu0 0.0
        %835 = vmatprep.subr.mxu0 0.0
        %836 = vmatpush1.msra.mxu0 0.0
        %837 = vmatprep.subr.mxu0 0.0
        %838 = vmatpush1.msra.mxu0 0.0
        %839 = vmatprep.subr.mxu0 0.0
        %840 = vmatpush1.msra.mxu0 0.0
        %841 = vmatprep.subr.mxu0 0.0
        %842 = vmatpush1.msra.mxu0 0.0
        %843 = vmatprep.subr.mxu0 0.0
        %844 = vmatpush1.msra.mxu0 0.0
        %845 = vmatprep.subr.mxu0 0.0
        %846 = vmatpush1.msra.mxu0 0.0
        %847 = vmatprep.subr.mxu0 0.0
        %848 = vmatpush1.msra.mxu0 0.0
        %849 = vmatprep.subr.mxu0 0.0
        %850 = vmatpush1.msra.mxu0 0.0
        %851 = vmatprep.subr.mxu0 0.0
        %852 = vmatpush1.msra.mxu0 0.0
        %853 = vmatprep.subr.mxu0 0.0
        %854 = vmatpush1.msra.mxu0 0.0
        %855 = vmatprep.subr.mxu0 0.0
        %856 = vmatpush1.msra.mxu0 0.0
        %857 = vmatprep.subr.mxu0 0.0
        %858 = vmatpush1.msra.mxu0 0.0
        %859 = vmatprep.subr.mxu0 0.0
        %860 = vmatpush1.msra.mxu0 0.0
        %861 = vmatprep.subr.mxu0 0.0
        %862 = vmatpush1.msra.mxu0 0.0
        %863 = vmatprep.subr.mxu0 0.0
        %864 = vmatpush1.msra.mxu0 0.0
        %865 = vmatprep.subr.mxu0 0.0
        %866 = vmatpush1.msra.mxu0 0.0
        %867 = vmatprep.subr.mxu0 0.0
        %868 = vmatpush1.msra.mxu0 0.0
        %869 = vmatprep.subr.mxu0 0.0
        %870 = vmatpush1.msra.mxu0 0.0
        %871 = vmatprep.subr.mxu0 0.0
        %872 = vmatpush1.msra.mxu0 0.0
        %873 = vmatprep.subr.mxu0 0.0
        %874 = vmatpush1.msra.mxu0 0.0
        %875 = vmatprep.subr.mxu0 0.0
        %876 = vmatpush1.msra.mxu0 0.0
        %877 = vmatprep.mubr.f32.mxu0 0.0
        %878 = vmatmul.mubr.f32.gmra.mrb[0].mxu0 %v766
        %v879 = vpop.f32.mrb[0].mxu0
        %v880 = vadd.f32 %v762, %v879
        %v881 = vpop.f32.mrb[0].mxu0
        %882 = vmatprep.mubr.f32.mxu0 0.0
        %883 = vmatmul.mubr.f32.gmra.mrb[0].mxu0 %v769
        %v884 = vpop.f32.mrb[0].mxu0
        %v885 = vadd.f32 %v762, %v884
        %v886 = vpop.f32.mrb[0].mxu0
        %887 = vmatprep.mubr.f32.mxu0 0.0
        %888 = vmatmul.mubr.f32.gmra.mrb[0].mxu0 %v772
        %v889 = vpop.f32.mrb[0].mxu0
        %v890 = vadd.f32 %v762, %v889
        %v891 = vpop.f32.mrb[0].mxu0
        %892 = vmatprep.mubr.f32.mxu0 0.0
        %893 = vmatmul.mubr.f32.gmra.mrb[0].mxu0 %v775
        %v894 = vpop.f32.mrb[0].mxu0
        %v895 = vadd.f32 %v762, %v894
        %v896 = vpop.f32.mrb[0].mxu0
        %897 = vmatprep.mubr.f32.mxu0 0.0
        %898 = vmatmul.mubr.f32.gmra.mrb[0].mxu0 %v778
        %v899 = vpop.f32.mrb[0].mxu0
        %v900 = vadd.f32 %v762, %v899
        %v901 = vpop.f32.mrb[0].mxu0
        %902 = vmatprep.mubr.f32.mxu0 0.0
        %903 = vmatmul.mubr.f32.gmra.mrb[0].mxu0 %v781
        %v904 = vpop.f32.mrb[0].mxu0
        %v905 = vadd.f32 %v762, %v904
        %v906 = vpop.f32.mrb[0].mxu0
        %907 = vmatprep.mubr.f32.mxu0 0.0
        %908 = vmatmul.mubr.f32.gmra.mrb[0].mxu0 %v784
        %v909 = vpop.f32.mrb[0].mxu0
        %v910 = vadd.f32 %v762, %v909
        %v911 = vpop.f32.mrb[0].mxu0
        %912 = vmatprep.mubr.f32.mxu0 0.0
        %913 = vmatmul.mubr.f32.gmra.mrb[0].mxu0 %v787
        %v914 = vpop.f32.mrb[0].mxu0
        %v915 = vadd.f32 %v762, %v914
        %v916 = vpop.f32.mrb[0].mxu0
        %917 = vmatprep.mubr.f32.mxu0 0.0
        %918 = vmatmul.mubr.f32.gmra.mrb[0].mxu0 %v790
        %v919 = vpop.f32.mrb[0].mxu0
        %v920 = vadd.f32 %v762, %v919
        %v921 = vpop.f32.mrb[0].mxu0
        %922 = vmatprep.mubr.f32.mxu0 0.0
        %923 = vmatmul.mubr.f32.gmra.mrb[0].mxu0 %v793
        %v924 = vpop.f32.mrb[0].mxu0
        %v925 = vadd.f32 %v762, %v924
        %v926 = vpop.f32.mrb[0].mxu0
        %927 = vmatprep.mubr.f32.mxu0 0.0
        %928 = vmatmul.mubr.f32.gmra.mrb[0].mxu0 %v796
        %v929 = vpop.f32.mrb[0].mxu0
        %v930 = vadd.f32 %v762, %v929
        %v931 = vpop.f32.mrb[0].mxu0
        %932 = vmatprep.mubr.f32.mxu0 0.0
        %933 = vmatmul.mubr.f32.gmra.mrb[0].mxu0 %v799
        %v934 = vpop.f32.mrb[0].mxu0
        %v935 = vadd.f32 %v762, %v934
        %v936 = vpop.f32.mrb[0].mxu0
        %937 = vmatprep.mubr.f32.mxu0 0.0
        %938 = vmatmul.mubr.f32.gmra.mrb[0].mxu0 %v802
        %v939 = vpop.f32.mrb[0].mxu0
        %v940 = vadd.f32 %v762, %v939
        %v941 = vpop.f32.mrb[0].mxu0
        %942 = vmatprep.mubr.f32.mxu0 0.0
        %943 = vmatmul.mubr.f32.gmra.mrb[0].mxu0 %v805
        %v944 = vpop.f32.mrb[0].mxu0
        %v945 = vadd.f32 %v762, %v944
        %v946 = vpop.f32.mrb[0].mxu0
        %947 = vmatprep.mubr.f32.mxu0 0.0
        %948 = vmatmul.mubr.f32.gmra.mrb[0].mxu0 %v808
        %v949 = vpop.f32.mrb[0].mxu0
        %v950 = vadd.f32 %v762, %v949
        %v951 = vpop.f32.mrb[0].mxu0
        %952 = vmatprep.mubr.f32.mxu0 0.0
        %953 = vmatmul.mubr.f32.gmra.mrb[0].mxu0 %v811
        %v954 = vpop.f32.mrb[0].mxu0
        %v955 = vadd.f32 %v762, %v954
        %v956 = vpop.f32.mrb[0].mxu0
        %957 = vdwg.mxu0
        %s958 = scalar_lea.vmem %s280, %s304
        %vm959 = vcmask 31744
        %960 = vst.msk [vmem:[%s958] sm:$0xff] %vm959, %v880
        %961 = vst.msk [vmem:[%s958 + $0x8] sm:$0xff] %vm959, %v885
        %962 = vst.msk [vmem:[%s958 + $0x10] sm:$0xff] %vm959, %v890
        %963 = vst.msk [vmem:[%s958 + $0x18] sm:$0xff] %vm959, %v895
        %964 = vst.msk [vmem:[%s958 + $0x20] sm:$0xff] %vm959, %v900
        %965 = vst.msk [vmem:[%s958 + $0x28] sm:$0xff] %vm959, %v905
        %966 = vst.msk [vmem:[%s958 + $0x30] sm:$0xff] %vm959, %v910
        %967 = vst.msk [vmem:[%s958 + $0x38] sm:$0xff] %vm959, %v915
        %968 = vst.msk [vmem:[%s958 + $0x40] sm:$0xff] %vm959, %v920
        %969 = vst.msk [vmem:[%s958 + $0x48] sm:$0xff] %vm959, %v925
        %970 = vst.msk [vmem:[%s958 + $0x50] sm:$0xff] %vm959, %v930
        %971 = vst.msk [vmem:[%s958 + $0x58] sm:$0xff] %vm959, %v935
        %972 = vst.msk [vmem:[%s958 + $0x60] sm:$0xff] %vm959, %v940
        %973 = vst.msk [vmem:[%s958 + $0x68] sm:$0xff] %vm959, %v945
        %974 = vst.msk [vmem:[%s958 + $0x70] sm:$0xff] %vm959, %v950
        %975 = vst.msk [vmem:[%s958 + $0x78] sm:$0xff] %vm959, %v955
      $region53: #{fnn_online_forward.1} parent=47 // loop_footer
        %s303 = sadd.s32 1, %s299
      $region54: #{fnn_online_forward.1} parent=47 // loop_footer_branch
        %298 = sbr.rel target = $region50
      $region55: #{fnn_online_forward.1} parent=47 // loop_exit
        _
      %s976 = smul.u32 48, %s18
      %p977 = scmp.lt.s32.totalorder %s976, 95
      %s978 = scalar_select %p977, %s976, 95
      %s979 = smul.addr %s978, 8
      %s980 = scalar_lea.vmem %s7, %s979
      // Predicated region
      $region56: #{fnn_online_forward.1} parent=47 // pred_check
        %p981 = pneg %p188
      $region57: #{fnn_online_forward.1} parent=47 // pred_check_branch
        %983 = sbr.rel (%p981) target = $region59
      $region58: #{fnn_online_forward.1} parent=47 // pred_region
        %s984 = smul.u32 48, %s18
      $region59: #{fnn_online_forward.1} parent=47 // pred_fallthru
        _
    $region48: #{fnn_online_forward.1} parent=5 // pred_fallthru
      _
    %p985 = scmp.le.s32.totalorder 2, %s13
    // Predicated region
    $region60: #{fnn_online_forward.1} parent=5 // pred_check
      %p986 = pneg %p985
    $region61: #{fnn_online_forward.1} parent=5 // pred_check_branch
      %988 = sbr.rel (%p986) target = $region63
    $region62: #{fnn_online_forward.1} parent=5 // pred_region
      %s989 = ssub.s32 %s13, 2
      // Predicated region
      $region64: #{fnn_online_forward.1} parent=62 // pred_check
        %p990 = pneg %p194
      $region65: #{fnn_online_forward.1} parent=62 // pred_check_branch
        %992 = sbr.rel (%p990) target = $region67
      $region66: #{fnn_online_forward.1} parent=62 // pred_region
        %s993 = smul.u32 48, %s19
        %p994 = scmp.lt.s32.totalorder %s993, 95
        %s995 = scalar_select %p994, %s993, 95
        %s996 = smul.addr %s995, 8
        %s997 = scalar_lea.vmem %s7, %s996
      $region67: #{fnn_online_forward.1} parent=62 // pred_fallthru
        _
    $region63: #{fnn_online_forward.1} parent=5 // pred_fallthru
      _
  $region6: #{fnn_online_forward.1} parent=0 // loop_footer
    %s17 = sadd.s32 1, %s13
  $region7: #{fnn_online_forward.1} parent=0 // loop_footer_branch
    %12 = sbr.rel target = $region3
  $region8: #{fnn_online_forward.1} parent=0 // loop_exit
    _

</llo_original>
